<compile_context>
chip_gen: v5e
topology: v5e:2x2
jax: 0.10.0
libtpu: 0.0.40
codegen_flags: <defaults>
</compile_context>

<pallas_src>
import functools

import jax
import jax.numpy as jnp
from jax.experimental import pallas as pl
from jax.experimental.pallas import tpu as pltpu


def _round_up(x, m):
    return (x + m - 1) // m * m


def _logits_kernel(x_ref, w_ref, out_ref):
    """One (M-tile, V-tile) block of logits.

    x_ref:   (tile_m, E)      bf16 activations (resident across the vocab axis)
    w_ref:   (E, tile_v)      bf16 output-head weight tile (leading tile axis squeezed)
    out_ref: (tile_m, tile_v) f32 logits tile (edge blocks masked on store)
    """
    out_ref[...] = jnp.dot(
        x_ref[...], w_ref[...], preferred_element_type=jnp.float32
    )


def prepare_out_head_weight(w_out, tile_v=512):
    """One-time layout prep of nn.Linear(E, V, bias=False).weight.

    w_out: (V, E) float32  ->  (V_pad // tile_v, E, tile_v) bfloat16, so each
    per-vocab-tile DMA is a single contiguous HBM burst. Vocab is zero-padded
    to a multiple of tile_v (padded columns produce logits that are never
    stored thanks to output edge-block masking).
    """
    vocab, emb = w_out.shape
    tile_v = min(tile_v, _round_up(vocab, 128))
    v_pad = _round_up(vocab, tile_v)
    w_t = jnp.transpose(w_out)                               # (E, V)
    w_t = jnp.pad(w_t, ((0, 0), (0, v_pad - vocab)))         # (E, V_pad)
    w_t = w_t.astype(jnp.bfloat16)
    w_tiles = w_t.reshape(emb, v_pad // tile_v, tile_v).transpose(1, 0, 2)
    return w_tiles                                           # (n_v, E, tile_v)


@functools.partial(jax.jit, static_argnames=("vocab_size", "tile_m"))
def dummy_gpt_forward(in_idx, tok_emb, pos_emb, w_tiles, *, vocab_size, tile_m=1024):
    """Pallas-backed DummyGPTModel forward.

    in_idx:   (B, S) int32 token ids
    tok_emb:  (V, E) float32 token embedding table
    pos_emb:  (C, E) float32 positional embedding table (C >= S)
    w_tiles:  (V_pad//tile_v, E, tile_v) bfloat16 pre-laid-out output head
    returns:  (B, S, V) float32 logits
    """
    batch, seq = in_idx.shape
    emb = tok_emb.shape[1]
    n_v, _, tile_v = w_tiles.shape
    v_pad = n_v * tile_v

    # Embedding gather + positional add + bf16 cast: fused XLA glue, executed once.
    # TODO(synk): fuse the token-embedding gather into the kernel (scalar-prefetched
    # in_idx + manual DMA row gather) to avoid the (M, E) HBM round trip.
    # TODO(synk): nn.Dropout is treated as identity (inference semantics); PyTorch
    # train-mode dropout RNG is not replicated.
    x = jnp.take(tok_emb, in_idx, axis=0) + pos_emb[:seq][None, :, :]   # (B, S, E) f32
    x = x.astype(jnp.bfloat16).reshape(batch * seq, emb)                # (M, E) bf16
    # Transformer blocks / final norm are identity in the Dummy* modules.

    m = batch * seq
    tile_m = min(tile_m, _round_up(m, 8))
    m_pad = _round_up(m, tile_m)
    if m_pad != m:
        x = jnp.pad(x, ((0, m_pad - m), (0, 0)))   # cheap (bf16 activations only)
    n_m = m_pad // tile_m

    # Output buffer: keep the (large) vocab axis UNPADDED whenever tile_v fits,
    # so we never materialize a padded f32 logits copy in HBM (dominant cost at
    # GPT-2 scale). The last vocab tile becomes a masked partial store instead.
    out_rows = m_pad
    out_cols = vocab_size if vocab_size >= tile_v else v_pad

    # Grid: M outer (x tile stays VMEM-resident across the vocab sweep),
    # vocab inner (weight streamed; re-read only n_m times).
    grid = (n_m, n_v)

    # Double-buffered tile footprint + headroom; safe under v7x's 64 MiB VMEM.
    tile_bytes = 2 * (tile_m * emb * 2 + emb * tile_v * 2 + tile_m * tile_v * 4)
    vmem_limit = int(min(48 * 1024 * 1024, max(16 * 1024 * 1024, 2 * tile_bytes)))

    cost = pl.CostEstimate(
        flops=2 * m_pad * emb * v_pad,
        transcendentals=0,
        bytes_accessed=(m_pad * emb * 2) + n_m * (emb * v_pad * 2)
        + (out_rows * out_cols * 4),
    )

    out = pl.pallas_call(
        _logits_kernel,
        out_shape=jax.ShapeDtypeStruct((out_rows, out_cols), jnp.float32),
        grid_spec=pltpu.PrefetchScalarGridSpec(
            num_scalar_prefetch=0,
            grid=grid,
            in_specs=[
                pl.BlockSpec((tile_m, emb), lambda i, j: (i, 0)),
                # Leading vocab-tile axis squeezed: kernel sees (E, tile_v); each
                # tile is contiguous in HBM thanks to the pre-layout.
                pl.BlockSpec((None, emb, tile_v), lambda i, j: (j, 0, 0)),
            ],
            out_specs=pl.BlockSpec((tile_m, tile_v), lambda i, j: (i, j)),
        ),
        compiler_params=pltpu.CompilerParams(
            dimension_semantics=("parallel", "parallel"),
            vmem_limit_bytes=vmem_limit,
        ),
        cost_estimate=cost,
    )(x, w_tiles)

    if out_rows != m or out_cols != vocab_size:
        out = out[:m, :vocab_size]
    return out.reshape(batch, seq, vocab_size)


if __name__ == "__main__":
    # Small config consistent with the DummyGPTModel constructor shapes.
    # vocab_size deliberately NOT a multiple of the vocab tile (exercises the
    # masked edge vocab tile, matching real GPT-2's 50257).
    cfg = {
        "vocab_size": 1000,
        "context_length": 64,
        "emb_dim": 128,
    }
    batch, seq = 2, 8

    key = jax.random.PRNGKey(0)
    k_tok, k_pos, k_out, k_idx = jax.random.split(key, 4)

    # Deterministic parameter init (nn.Embedding ~ N(0,1); nn.Linear scaled).
    tok_emb = jax.random.normal(k_tok, (cfg["vocab_size"], cfg["emb_dim"]), jnp.float32)
    pos_emb = jax.random.normal(
        k_pos, (cfg["context_length"], cfg["emb_dim"]), jnp.float32
    )
    # nn.Linear(emb_dim, vocab_size, bias=False).weight has shape (V, E).
    w_out = jax.random.normal(
        k_out, (cfg["vocab_size"], cfg["emb_dim"]), jnp.float32
    ) * (1.0 / jnp.sqrt(cfg["emb_dim"]))

    in_idx = jax.random.randint(k_idx, (batch, seq), 0, cfg["vocab_size"], jnp.int32)

    # One-time weight layout prep (bf16 + contiguous vocab tiles).
    w_tiles = prepare_out_head_weight(w_out, tile_v=512)

    logits = dummy_gpt_forward(
        in_idx, tok_emb, pos_emb, w_tiles, vocab_size=cfg["vocab_size"]
    )
    logits = jax.block_until_ready(logits)

    # References.
    x_f32 = jnp.take(tok_emb, in_idx, axis=0) + pos_emb[:seq][None]
    ref_f32 = jnp.einsum("bse,ve->bsv", x_f32, w_out)
    ref_bf16 = jnp.einsum(
        "bse,ve->bsv",
        x_f32.astype(jnp.bfloat16),
        w_out.astype(jnp.bfloat16),
        preferred_element_type=jnp.float32,
    )

    assert logits.shape == (batch, seq, cfg["vocab_size"])
    # Same-numerics reference (bf16 operands, f32 accumulation): tight check.
    assert jnp.allclose(logits, ref_bf16, atol=2e-2, rtol=2e-2), float(
        jnp.max(jnp.abs(logits - ref_bf16))
    )
    # Full-f32 reference: loose check (bf16 operand quantization).
    assert jnp.allclose(logits, ref_f32, atol=0.5, rtol=0.1)

    print("KERNEL_OK")
</pallas_src>

<mosaic_0001>
module attributes {stable_mosaic.version = 11 : i64} {
  func.func @_logits_kernel(%arg0: i32, %arg1: i32, %arg2: memref<16x128xbf16, #tpu.memory_space<vmem>>, %arg3: memref<1x128x512xbf16, #tpu.memory_space<vmem>>, %arg4: memref<16x512xf32, #tpu.memory_space<vmem>>) attributes {dimension_semantics = [#tpu.dimension_semantics<parallel>, #tpu.dimension_semantics<parallel>], iteration_bounds = array<i64: 1, 2>, scalar_prefetch = 0 : i64, scratch_operands = 0 : i64, tpu.core_type = #tpu.core_type<tc>, window_params = [{transform_indices = @transform_0, window_bounds = array<i64: 16, 128>}, {transform_indices = @transform_1, window_bounds = array<i64: 1, 128, 512>}, {transform_indices = @transform_2, window_bounds = array<i64: 16, 512>}]} {
    %c0 = arith.constant 0 : index
    %c0_0 = arith.constant 0 : index
    %0 = vector.load %arg2[%c0, %c0_0] : memref<16x128xbf16, #tpu.memory_space<vmem>>, vector<16x128xbf16>
    %c0_1 = arith.constant 0 : index
    %c0_2 = arith.constant 0 : index
    %c0_3 = arith.constant 0 : index
    %1 = vector.load %arg3[%c0_1, %c0_2, %c0_3] : memref<1x128x512xbf16, #tpu.memory_space<vmem>>, vector<1x128x512xbf16>
    %2 = vector.shape_cast %1 : vector<1x128x512xbf16> to vector<128x512xbf16>
    %cst = arith.constant dense<0.000000e+00> : vector<16x512xf32>
    %3 = tpu.matmul %0, %2, %cst {dimension_numbers = #tpu.dot_dimension_numbers<[1], [0], [0], [1], [0, 0, 1, 1], [], []>} : vector<16x128xbf16>, vector<128x512xbf16>, vector<16x512xf32> -> vector<16x512xf32>
    %c0_4 = arith.constant 0 : index
    %c0_5 = arith.constant 0 : index
    %4 = vector.load %arg4[%c0_4, %c0_5] : memref<16x512xf32, #tpu.memory_space<vmem>>, vector<16x512xf32>
    tpu.vector_store %arg4[%c0_4, %c0_5], %3 {strides = array<i32>} : memref<16x512xf32, #tpu.memory_space<vmem>>, vector<16x512xf32>,
    return
  }
  func.func @transform_0(%arg0: i32, %arg1: i32) -> (i32, i32) {
    %c0_i32 = arith.constant 0 : i32
    %c0_i32_0 = arith.constant 0 : i32
    return %arg0, %c0_i32 : i32, i32
  }
  func.func @transform_1(%arg0: i32, %arg1: i32) -> (i32, i32, i32) {
    %c0_i32 = arith.constant 0 : i32
    %c0_i32_0 = arith.constant 0 : i32
    %c0_i32_1 = arith.constant 0 : i32
    return %arg1, %c0_i32, %c0_i32_0 : i32, i32, i32
  }
  func.func @transform_2(%arg0: i32, %arg1: i32) -> (i32, i32) {
    %c0_i32 = arith.constant 0 : i32
    return %arg0, %arg1 : i32, i32
  }
}

</mosaic_0001>

<llo_original>
// kernel: dummy_gpt_forward.1
$region0: #{dummy_gpt_forward.1}
  #allocation0 [shape = 'u32[]', space=smem, size = 0x4, offset = 0x4, fixed_abs, tag = 'smem constant byte address 0x4 - core index']
  #allocation1 [shape = 'u32[72,128]{1,0:T(1,128)}', space=vmem, size = 0x9000, scoped, tag = 'internal scratch']
  %s0 = inlined_call_operand.vmem [shape: bf16[16,128], index: 0, kind: input, shape index: {}]
  %s1 = inlined_call_operand.hbm [shape: bf16[2,128,512], index: 1, kind: input, shape index: {}]
  %s2 = inlined_call_operand.hbm [shape: f32[16,1000], index: 2, kind: output, shape index: {}]
  %s3 = sld [smem:[#allocation0]]
  $region45: #{dummy_gpt_forward.1} parent=0
    _
  %s5 = ssub.s32 1, %s3
  %s6 = scalar_select 0, %s5, %s3
  $region1: #{dummy_gpt_forward.1} parent=0
    #allocation2 [shape = 'u8[262144]{0}', space=vmem, size = 0x40000, scoped, tag = 'input window, operand 1']
    #allocation3 [shape = 's32[2]{0}', space=sflag, size = 0x8, scoped, tag = 'scoped memory for dummy_gpt_forward.1']
    #allocation4 [shape = 's32[2]{0}', space=sflag, size = 0x8, scoped, tag = 'scoped memory for dummy_gpt_forward.1']
    #allocation5 [shape = 'u8[65536]{0}', space=vmem, size = 0x10000, scoped, tag = 'output window, operand 0']
    %7 = vsyncpa [#allocation3], 0
    %s8 = scalar_lea.sflag [#allocation3], 1
    %9 = vsyncpa %s8, 0
    %10 = vsyncpa [#allocation4], 0
    %s11 = scalar_lea.sflag [#allocation4], 1
    %12 = vsyncpa %s11, 0
    loop: start=0, step=1, limit=4
    $region2: #{dummy_gpt_forward.1} parent=1 // loop_pre_header
      _
    $region3: #{dummy_gpt_forward.1} parent=1 // loop_header
      %s14 = sphi 0, %s18
      %p15 = scmp.ge.s32.totalorder %s14, 4
      %s21 = sphi 0, %s33
      %s22 = sphi 0, %s29
      %s23 = sphi 0, %s21
      %s24 = sphi 0, %s22
      %s25 = sphi 0, %s23
      %s26 = sphi 0, %s24
      %s36 = sphi 0, %s38
      %s39 = sphi 0, %s36
      %s40 = sphi 0, %s39
      %s56 = sphi 0, %s40
      %s62 = sphi 0, %s64
      %s65 = sphi 0, %s62
      %s66 = sphi 0, %s65
      %s82 = sphi 0, %s66
      %s90 = sphi 0, %s92
      %s93 = sphi 0, %s90
      %s94 = sphi 0, %s93
      %s110 = sphi 0, %s94
    $region4: #{dummy_gpt_forward.1} parent=1 // loop_header_branch
      %17 = sbr.rel (%p15) target = $region8
    $region5: #{dummy_gpt_forward.1} parent=1 // loop_body
      %s19 = ssub.s32 %s14, 1
      %s20 = ssub.s32 %s14, 2
      %s27 = sadd.s32 1, %s22
      %p28 = scmp.ge.s32.totalorder %s27, 2
      %s29 = scalar_select %p28, 0, %s27
      %s30 = sadd.s32 1, %s21
      %s31 = scalar_select %p28, %s30, %s21
      %p32 = scmp.ge.s32.totalorder %s31, 1
      %s33 = scalar_select %p32, 0, %s31
      %s34 = ssub.s32 %s21, %s33
      %p35 = scmp.eq.s32.totalorder %s34, 0
      %s37 = sadd.s32 %s36, 1
      %s38 = scalar_select %p35, %s36, %s37
      %p41 = pneg %p35
      %p42 = scmp.eq.s32.totalorder %s14, 1
      %p43 = por %p41, %p42
      %p44 = scmp.ne.s32.totalorder %s36, %s39
      %p45 = scmp.eq.s32.totalorder %s14, 0
      %p46 = por %p44, %p45
      %p47 = scmp.ne.s32.totalorder %s36, %s39
      %p48 = scmp.eq.s32.totalorder %s19, 1
      %p49 = por %p47, %p48
      %p50 = scmp.ne.s32.totalorder %s39, %s40
      %p51 = scmp.eq.s32.totalorder %s19, 0
      %p52 = por %p50, %p51
      %p53 = scmp.ne.s32.totalorder %s39, %s40
      %p54 = scmp.eq.s32.totalorder %s20, 1
      %p55 = por %p53, %p54
      %p57 = scmp.ne.s32.totalorder %s40, %s56
      %p58 = scmp.eq.s32.totalorder %s20, 0
      %p59 = por %p57, %p58
      %s60 = ssub.s32 %s22, %s29
      %p61 = scmp.eq.s32.totalorder %s60, 0
      %s63 = sadd.s32 %s62, 1
      %s64 = scalar_select %p61, %s62, %s63
      %p67 = pneg %p61
      %p68 = scmp.eq.s32.totalorder %s14, 1
      %p69 = por %p67, %p68
      %p70 = scmp.ne.s32.totalorder %s62, %s65
      %p71 = scmp.eq.s32.totalorder %s14, 0
      %p72 = por %p70, %p71
      %p73 = scmp.ne.s32.totalorder %s62, %s65
      %p74 = scmp.eq.s32.totalorder %s19, 1
      %p75 = por %p73, %p74
      %p76 = scmp.ne.s32.totalorder %s65, %s66
      %p77 = scmp.eq.s32.totalorder %s19, 0
      %p78 = por %p76, %p77
      %p79 = scmp.ne.s32.totalorder %s65, %s66
      %p80 = scmp.eq.s32.totalorder %s20, 1
      %p81 = por %p79, %p80
      %p83 = scmp.ne.s32.totalorder %s66, %s82
      %p84 = scmp.eq.s32.totalorder %s20, 0
      %p85 = por %p83, %p84
      %s86 = ssub.s32 %s21, %s33
      %s87 = ssub.s32 %s22, %s29
      %s88 = sor.u32 %s86, %s87
      %p89 = scmp.eq.s32.totalorder %s88, 0
      %s91 = sadd.s32 %s90, 1
      %s92 = scalar_select %p89, %s90, %s91
      %p95 = pneg %p89
      %p96 = scmp.eq.s32.totalorder %s14, 1
      %p97 = por %p95, %p96
      %p98 = scmp.ne.s32.totalorder %s90, %s93
      %p99 = scmp.eq.s32.totalorder %s14, 0
      %p100 = por %p98, %p99
      %p101 = scmp.ne.s32.totalorder %s90, %s93
      %p102 = scmp.eq.s32.totalorder %s19, 1
      %p103 = por %p101, %p102
      %p104 = scmp.ne.s32.totalorder %s93, %s94
      %p105 = scmp.eq.s32.totalorder %s19, 0
      %p106 = por %p104, %p105
      %p107 = scmp.ne.s32.totalorder %s93, %s94
      %p108 = scmp.eq.s32.totalorder %s20, 1
      %p109 = por %p107, %p108
      %p111 = scmp.ne.s32.totalorder %s94, %s110
      %p112 = scmp.eq.s32.totalorder %s20, 0
      %p113 = por %p111, %p112
      %p114 = scmp.le.s32.totalorder 1, %s14
      %p115 = scmp.lt.s32.totalorder %s14, 3
      %p116 = pnand %p114, %p115
      %p117 = pneg %p116
      // Predicated region
      $region9: #{dummy_gpt_forward.1} parent=5 // pred_check
        _
      $region10: #{dummy_gpt_forward.1} parent=5 // pred_check_branch
        %119 = sbr.rel (%p116) target = $region12
      $region11: #{dummy_gpt_forward.1} parent=5 // pred_region
        %s120 = ssub.s32 %s14, 1
        // Predicated region
        $region13: #{dummy_gpt_forward.1} parent=11 // pred_check
          %p121 = pneg %p52
        $region14: #{dummy_gpt_forward.1} parent=11 // pred_check_branch
          %123 = sbr.rel (%p121) target = $region16
        $region15: #{dummy_gpt_forward.1} parent=11 // pred_region
          %s124 = smul.u32 2, %s23
          %p125 = scmp.lt.s32.totalorder %s124, 1
          %s126 = scalar_select %p125, %s124, 1
          %s127 = smul.addr %s126, 4
          %s128 = scalar_lea.vmem %s0, %s127
          %s129 = smul.u32 2, %s23
        $region16: #{dummy_gpt_forward.1} parent=11 // pred_fallthru
          _
      $region12: #{dummy_gpt_forward.1} parent=5 // pred_fallthru
        _
      %p130 = scmp.lt.s32.totalorder %s14, 2
      // Predicated region
      $region17: #{dummy_gpt_forward.1} parent=5 // pred_check
        %p131 = pneg %p130
      $region18: #{dummy_gpt_forward.1} parent=5 // pred_check_branch
        %133 = sbr.rel (%p131) target = $region20
      $region19: #{dummy_gpt_forward.1} parent=5 // pred_region
        // Predicated region
        $region21: #{dummy_gpt_forward.1} parent=19 // pred_check
          %p134 = pneg %p72
        $region22: #{dummy_gpt_forward.1} parent=19 // pred_check_branch
          %136 = sbr.rel (%p134) target = $region24
        $region23: #{dummy_gpt_forward.1} parent=19 // pred_region
          %s137 = sand.u32 %s62, 1
          %s138 = scalar_lea.sflag [#allocation3], %s137
          %s139 = sand.u32 %s62, 1
          %s140 = smul.addr %s139, 256
          %s141 = scalar_lea.vmem [#allocation2], %s140
          %143 = vsyncadd %s138, 0
          %s144 = smul.addr %s22, 64
          %s145 = smul.addr %s144, 4
          %s146 = scalar_lea.hbm %s1, %s145
          %s147 = sshll.u32 %s146, 4
          %s148 = int_to_ptr.hbm [resolvable:$true] %s147
          %s149 = sshll.u32 %s141, 4
          %s150 = int_to_ptr.vmem [resolvable:$true] %s149
          %155 = dma.hbm_to_vmem [thread:$0]  %s148, 4096, %s150, %s138, 256, 256, 16
        $region24: #{dummy_gpt_forward.1} parent=19 // pred_fallthru
          _
      $region20: #{dummy_gpt_forward.1} parent=5 // pred_fallthru
        _
      %p156 = scmp.le.s32.totalorder 1, %s14
      %p157 = scmp.lt.s32.totalorder %s14, 3
      %p158 = pnand %p156, %p157
      %p159 = pneg %p158
      // Predicated region
      $region25: #{dummy_gpt_forward.1} parent=5 // pred_check
        _
      $region26: #{dummy_gpt_forward.1} parent=5 // pred_check_branch
        %161 = sbr.rel (%p158) target = $region28
      $region27: #{dummy_gpt_forward.1} parent=5 // pred_region
        %s162 = ssub.s32 %s14, 1
        %s163 = sand.u32 %s65, 1
        %s164 = scalar_lea.sflag [#allocation3], %s163
        %s165 = sand.u32 %s65, 1
        %s166 = smul.addr %s165, 256
        %s167 = scalar_lea.vmem [#allocation2], %s166
        // Predicated region
        $region29: #{dummy_gpt_forward.1} parent=27 // pred_check
          %p168 = pneg %p78
        $region30: #{dummy_gpt_forward.1} parent=27 // pred_check_branch
          %170 = sbr.rel (%p168) target = $region32
        $region31: #{dummy_gpt_forward.1} parent=27 // pred_region
          %172 = dma.done %s164, 4096
        $region32: #{dummy_gpt_forward.1} parent=27 // pred_fallthru
          _
        %s173 = smul.u32 2, %s23
        %p174 = scmp.lt.s32.totalorder %s173, 1
        %s175 = scalar_select %p174, %s173, 1
        %s176 = smul.addr %s175, 4
        %s177 = scalar_lea.vmem %s0, %s176
        %p178 = pneg %p52
        %p179 = pneg %p49
        %s180 = sand.u32 %s65, 1
        %s181 = scalar_lea.sflag [#allocation3], %s180
        %s182 = sand.u32 %s65, 1
        %s183 = smul.addr %s182, 256
        %s184 = scalar_lea.vmem [#allocation2], %s183
        %p185 = pneg %p78
        %p186 = pneg %p75
        %p187 = pneg %p106
        %p188 = pneg %p103
        %s189 = sand.u32 %s93, 1
        %s190 = scalar_lea.sflag [#allocation4], %s189
        %s191 = sand.u32 %s93, 1
        %s192 = smul.addr %s191, 64
        %s193 = scalar_lea.vmem [#allocation5], %s192
        %s194 = smul.u32 2, %s23
        %p195 = scmp.lt.s32.totalorder %s194, 1
        %s196 = scalar_select %p195, %s194, 1
        %s197 = smul.addr %s196, 4
        %s198 = scalar_lea.vmem %s0, %s197
        %s199 = smul.u32 2, %s23
        %s200 = smul.u32 2, %s23
        %s201 = smul.u32 4, %s24
        %v202 = vld [vmem:[%s198] sm:$0xf]
        %v203 = vld [vmem:[%s198 + $0x4] sm:$0xf]
        %v204 = vld [vmem:[%s167] sm:$0xff]
        %v205 = vld [vmem:[%s167 + $0x8] sm:$0xff]
        %v206 = vld [vmem:[%s167 + $0x10] sm:$0xff]
        %v207 = vld [vmem:[%s167 + $0x18] sm:$0xff]
        %v208 = vld [vmem:[%s167 + $0x20] sm:$0xff]
        %v209 = vld [vmem:[%s167 + $0x28] sm:$0xff]
        %v210 = vld [vmem:[%s167 + $0x30] sm:$0xff]
        %v211 = vld [vmem:[%s167 + $0x38] sm:$0xff]
        %v212 = vld [vmem:[%s167 + $0x40] sm:$0xff]
        %v213 = vld [vmem:[%s167 + $0x48] sm:$0xff]
        %v214 = vld [vmem:[%s167 + $0x50] sm:$0xff]
        %v215 = vld [vmem:[%s167 + $0x58] sm:$0xff]
        %v216 = vld [vmem:[%s167 + $0x60] sm:$0xff]
        %v217 = vld [vmem:[%s167 + $0x68] sm:$0xff]
        %v218 = vld [vmem:[%s167 + $0x70] sm:$0xff]
        %v219 = vld [vmem:[%s167 + $0x78] sm:$0xff]
        %v220 = vld [vmem:[%s167 + $0x80] sm:$0xff]
        %v221 = vld [vmem:[%s167 + $0x88] sm:$0xff]
        %v222 = vld [vmem:[%s167 + $0x90] sm:$0xff]
        %v223 = vld [vmem:[%s167 + $0x98] sm:$0xff]
        %v224 = vld [vmem:[%s167 + $0xa0] sm:$0xff]
        %v225 = vld [vmem:[%s167 + $0xa8] sm:$0xff]
        %v226 = vld [vmem:[%s167 + $0xb0] sm:$0xff]
        %v227 = vld [vmem:[%s167 + $0xb8] sm:$0xff]
        %v228 = vld [vmem:[%s167 + $0xc0] sm:$0xff]
        %v229 = vld [vmem:[%s167 + $0xc8] sm:$0xff]
        %v230 = vld [vmem:[%s167 + $0xd0] sm:$0xff]
        %v231 = vld [vmem:[%s167 + $0xd8] sm:$0xff]
        %v232 = vld [vmem:[%s167 + $0xe0] sm:$0xff]
        %v233 = vld [vmem:[%s167 + $0xe8] sm:$0xff]
        %v234 = vld [vmem:[%s167 + $0xf0] sm:$0xff]
        %v235 = vld [vmem:[%s167 + $0xf8] sm:$0xff]
        %v238 = vunpack.c.l.b16 %v202
        %v239 = vunpack.c.l.b16 %v203
        %v240 = vpack.c.b16 %v239, %v238
        %v274 = vunpack.c.l.b16 %v204
        %v275 = vunpack.c.h.b16 %v204
        %v276 = vunpack.c.l.b16 %v205
        %v277 = vunpack.c.h.b16 %v205
        %v278 = vunpack.c.l.b16 %v206
        %v279 = vunpack.c.h.b16 %v206
        %v280 = vunpack.c.l.b16 %v207
        %v281 = vunpack.c.h.b16 %v207
        %v282 = vunpack.c.l.b16 %v208
        %v283 = vunpack.c.h.b16 %v208
        %v284 = vunpack.c.l.b16 %v209
        %v285 = vunpack.c.h.b16 %v209
        %v286 = vunpack.c.l.b16 %v210
        %v287 = vunpack.c.h.b16 %v210
        %v288 = vunpack.c.l.b16 %v211
        %v289 = vunpack.c.h.b16 %v211
        %v290 = vunpack.c.l.b16 %v212
        %v291 = vunpack.c.h.b16 %v212
        %v292 = vunpack.c.l.b16 %v213
        %v293 = vunpack.c.h.b16 %v213
        %v294 = vunpack.c.l.b16 %v214
        %v295 = vunpack.c.h.b16 %v214
        %v296 = vunpack.c.l.b16 %v215
        %v297 = vunpack.c.h.b16 %v215
        %v298 = vunpack.c.l.b16 %v216
        %v299 = vunpack.c.h.b16 %v216
        %v300 = vunpack.c.l.b16 %v217
        %v301 = vunpack.c.h.b16 %v217
        %v302 = vunpack.c.l.b16 %v218
        %v303 = vunpack.c.h.b16 %v218
        %v304 = vunpack.c.l.b16 %v219
        %v305 = vunpack.c.h.b16 %v219
        %v306 = vunpack.c.l.b16 %v220
        %v307 = vunpack.c.h.b16 %v220
        %v308 = vunpack.c.l.b16 %v221
        %v309 = vunpack.c.h.b16 %v221
        %v310 = vunpack.c.l.b16 %v222
        %v311 = vunpack.c.h.b16 %v222
        %v312 = vunpack.c.l.b16 %v223
        %v313 = vunpack.c.h.b16 %v223
        %v314 = vunpack.c.l.b16 %v224
        %v315 = vunpack.c.h.b16 %v224
        %v316 = vunpack.c.l.b16 %v225
        %v317 = vunpack.c.h.b16 %v225
        %v318 = vunpack.c.l.b16 %v226
        %v319 = vunpack.c.h.b16 %v226
        %v320 = vunpack.c.l.b16 %v227
        %v321 = vunpack.c.h.b16 %v227
        %v322 = vunpack.c.l.b16 %v228
        %v323 = vunpack.c.h.b16 %v228
        %v324 = vunpack.c.l.b16 %v229
        %v325 = vunpack.c.h.b16 %v229
        %v326 = vunpack.c.l.b16 %v230
        %v327 = vunpack.c.h.b16 %v230
        %v328 = vunpack.c.l.b16 %v231
        %v329 = vunpack.c.h.b16 %v231
        %v330 = vunpack.c.l.b16 %v232
        %v331 = vunpack.c.h.b16 %v232
        %v332 = vunpack.c.l.b16 %v233
        %v333 = vunpack.c.h.b16 %v233
        %v334 = vunpack.c.l.b16 %v234
        %v335 = vunpack.c.h.b16 %v234
        %v336 = vunpack.c.l.b16 %v235
        %v337 = vunpack.c.h.b16 %v235
        %v338 = vpack.c.b16 %v278, %v274
        %v339 = vpack.c.b16 %v279, %v275
        %v340 = vpack.c.b16 %v280, %v276
        %v341 = vpack.c.b16 %v281, %v277
        %v342 = vpack.c.b16 %v286, %v282
        %v343 = vpack.c.b16 %v287, %v283
        %v344 = vpack.c.b16 %v288, %v284
        %v345 = vpack.c.b16 %v289, %v285
        %v346 = vpack.c.b16 %v294, %v290
        %v347 = vpack.c.b16 %v295, %v291
        %v348 = vpack.c.b16 %v296, %v292
        %v349 = vpack.c.b16 %v297, %v293
        %v350 = vpack.c.b16 %v302, %v298
        %v351 = vpack.c.b16 %v303, %v299
        %v352 = vpack.c.b16 %v304, %v300
        %v353 = vpack.c.b16 %v305, %v301
        %v354 = vpack.c.b16 %v310, %v306
        %v355 = vpack.c.b16 %v311, %v307
        %v356 = vpack.c.b16 %v312, %v308
        %v357 = vpack.c.b16 %v313, %v309
        %v358 = vpack.c.b16 %v318, %v314
        %v359 = vpack.c.b16 %v319, %v315
        %v360 = vpack.c.b16 %v320, %v316
        %v361 = vpack.c.b16 %v321, %v317
        %v362 = vpack.c.b16 %v326, %v322
        %v363 = vpack.c.b16 %v327, %v323
        %v364 = vpack.c.b16 %v328, %v324
        %v365 = vpack.c.b16 %v329, %v325
        %v366 = vpack.c.b16 %v334, %v330
        %v367 = vpack.c.b16 %v335, %v331
        %v368 = vpack.c.b16 %v336, %v332
        %v369 = vpack.c.b16 %v337, %v333
        %402 = vmatpush.bf16.msra.mxu0 %v366
        %403 = vmatpush.bf16.msra.mxu0 %v362
        %404 = vmatpush.bf16.msra.mxu0 %v358
        %405 = vmatpush.bf16.msra.mxu0 %v354
        %406 = vmatpush.bf16.msra.mxu0 %v350
        %407 = vmatpush.bf16.msra.mxu0 %v346
        %408 = vmatpush.bf16.msra.mxu0 %v342
        %409 = vmatpush.bf16.msra.mxu0 %v338
        %410 = vmatmul.bf16.gmra.mxu0 %v240
        %v411 = vpop.f32.mrf.mxu0
        %v412 = vadd.f32 0.0, %v411
        %v413 = vpop.f32.mrf.mxu0
        %v414 = vadd.f32 0.0, %v413
        %415 = vdwg.mxu0
        %416 = vmatpush.bf16.msra.mxu0 %v367
        %417 = vmatpush.bf16.msra.mxu0 %v363
        %418 = vmatpush.bf16.msra.mxu0 %v359
        %419 = vmatpush.bf16.msra.mxu0 %v355
        %420 = vmatpush.bf16.msra.mxu0 %v351
        %421 = vmatpush.bf16.msra.mxu0 %v347
        %422 = vmatpush.bf16.msra.mxu0 %v343
        %423 = vmatpush.bf16.msra.mxu0 %v339
        %424 = vmatmul.bf16.gmra.mxu0 %v240
        %v425 = vpop.f32.mrf.mxu0
        %v426 = vadd.f32 0.0, %v425
        %v427 = vpop.f32.mrf.mxu0
        %v428 = vadd.f32 0.0, %v427
        %429 = vdwg.mxu0
        %430 = vmatpush.bf16.msra.mxu0 %v368
        %431 = vmatpush.bf16.msra.mxu0 %v364
        %432 = vmatpush.bf16.msra.mxu0 %v360
        %433 = vmatpush.bf16.msra.mxu0 %v356
        %434 = vmatpush.bf16.msra.mxu0 %v352
        %435 = vmatpush.bf16.msra.mxu0 %v348
        %436 = vmatpush.bf16.msra.mxu0 %v344
        %437 = vmatpush.bf16.msra.mxu0 %v340
        %438 = vmatmul.bf16.gmra.mxu0 %v240
        %v439 = vpop.f32.mrf.mxu0
        %v440 = vadd.f32 0.0, %v439
        %v441 = vpop.f32.mrf.mxu0
        %v442 = vadd.f32 0.0, %v441
        %443 = vdwg.mxu0
        %444 = vmatpush.bf16.msra.mxu0 %v369
        %445 = vmatpush.bf16.msra.mxu0 %v365
        %446 = vmatpush.bf16.msra.mxu0 %v361
        %447 = vmatpush.bf16.msra.mxu0 %v357
        %448 = vmatpush.bf16.msra.mxu0 %v353
        %449 = vmatpush.bf16.msra.mxu0 %v349
        %450 = vmatpush.bf16.msra.mxu0 %v345
        %451 = vmatpush.bf16.msra.mxu0 %v341
        %452 = vmatmul.bf16.gmra.mxu0 %v240
        %v453 = vpop.f32.mrf.mxu0
        %v454 = vadd.f32 0.0, %v453
        %v455 = vpop.f32.mrf.mxu0
        %v456 = vadd.f32 0.0, %v455
        %457 = vdwg.mxu0
        %458 = vst [vmem:[%s193] sm:$0xff] %v412
        %459 = vst [vmem:[%s193 + $0x8] sm:$0xff] %v426
        %460 = vst [vmem:[%s193 + $0x10] sm:$0xff] %v440
        %461 = vst [vmem:[%s193 + $0x18] sm:$0xff] %v454
        %462 = vst [vmem:[%s193 + $0x20] sm:$0xff] %v414
        %463 = vst [vmem:[%s193 + $0x28] sm:$0xff] %v428
        %464 = vst [vmem:[%s193 + $0x30] sm:$0xff] %v442
        %465 = vst [vmem:[%s193 + $0x38] sm:$0xff] %v456
        %s466 = sand.u32 %s93, 1
        %s467 = scalar_lea.sflag [#allocation4], %s466
        %s468 = sand.u32 %s93, 1
        %s469 = smul.addr %s468, 64
        %s470 = scalar_lea.vmem [#allocation5], %s469
        // Predicated region
        $region33: #{dummy_gpt_forward.1} parent=27 // pred_check
          %p471 = pneg %p103
        $region34: #{dummy_gpt_forward.1} parent=27 // pred_check_branch
          %473 = sbr.rel (%p471) target = $region36
        $region35: #{dummy_gpt_forward.1} parent=27 // pred_region
          %s474 = smul.u32 2, %s23
          %s475 = smul.u32 4, %s24
          %477 = vsyncadd %s467, 0
          %s478 = smul.addr %s474, 8
          %s479 = sadd.s32 %s475, %s478
          %s480 = smul.addr %s479, 8
          %s481 = scalar_lea.hbm %s2, %s480
          %s482 = sshll.u32 %s470, 4
          %s483 = int_to_ptr.vmem [resolvable:$true] %s482
          %s484 = sshll.u32 %s481, 4
          %s485 = int_to_ptr.hbm [resolvable:$true] %s484
          %490 = dma.vmem_to_hbm [thread:$0]  %s483, 1024, %s485, %s467, 512, 1024, 32
        $region36: #{dummy_gpt_forward.1} parent=27 // pred_fallthru
          _
      $region28: #{dummy_gpt_forward.1} parent=5 // pred_fallthru
        _
      %p491 = scmp.le.s32.totalorder 2, %s14
      // Predicated region
      $region37: #{dummy_gpt_forward.1} parent=5 // pred_check
        %p492 = pneg %p491
      $region38: #{dummy_gpt_forward.1} parent=5 // pred_check_branch
        %494 = sbr.rel (%p492) target = $region40
      $region39: #{dummy_gpt_forward.1} parent=5 // pred_region
        %s495 = ssub.s32 %s14, 2
        // Predicated region
        $region41: #{dummy_gpt_forward.1} parent=39 // pred_check
          %p496 = pneg %p109
        $region42: #{dummy_gpt_forward.1} parent=39 // pred_check_branch
          %498 = sbr.rel (%p496) target = $region44
        $region43: #{dummy_gpt_forward.1} parent=39 // pred_region
          %s499 = sand.u32 %s94, 1
          %s500 = scalar_lea.sflag [#allocation4], %s499
          %s501 = sand.u32 %s94, 1
          %s502 = smul.addr %s501, 64
          %s503 = scalar_lea.vmem [#allocation5], %s502
          %505 = dma.done %s500, 1024
        $region44: #{dummy_gpt_forward.1} parent=39 // pred_fallthru
          _
      $region40: #{dummy_gpt_forward.1} parent=5 // pred_fallthru
        _
    $region6: #{dummy_gpt_forward.1} parent=1 // loop_footer
      %s18 = sadd.s32 1, %s14
    $region7: #{dummy_gpt_forward.1} parent=1 // loop_footer_branch
      %13 = sbr.rel target = $region3
    $region8: #{dummy_gpt_forward.1} parent=1 // loop_exit
      _
    %506 = vsyncpa [#allocation3], 1
    %s507 = scalar_lea.sflag [#allocation3], 1
    %508 = vsyncpa %s507, 1
    %509 = vsyncpa [#allocation4], 1
    %s510 = scalar_lea.sflag [#allocation4], 1
    %511 = vsyncpa %s510, 1

</llo_original>
